<compile_context>
chip_gen: v7x
topology: tpu7x:2x2x1
jax: 0.10.0
libtpu: 0.0.40
codegen_flags: <defaults>
</compile_context>

<pallas_src>
import jax
import jax.numpy as jnp
from jax import lax
from jax.experimental import pallas as pl
from jax.experimental.pallas import tpu as pltpu


# --------------------------------------------------------------------------- kernel

def _disparity_regression_kernel(x_ref, o_ref):
    # x_ref block: (D, TR, 128)   (batch dim squeezed)
    # o_ref block: (TR, 128)      (batch dim squeezed; channel dim added back outside)
    D = x_ref.shape[0]

    def body(d, carry):
        acc, w = carry
        # Dynamic index on the (untiled) leading axis -> clean whole-vreg loads.
        acc = acc + x_ref[d].astype(jnp.float32) * w
        return acc, w + jnp.float32(1.0)

    acc, _ = lax.fori_loop(
        0, D, body,
        (jnp.zeros(o_ref.shape, dtype=jnp.float32), jnp.float32(0.0)),
        unroll=min(int(D), 4),
    )
    o_ref[...] = acc.astype(o_ref.dtype)


# --------------------------------------------------------------------------- planner

def _per_buffer_budget_bytes():
    """Per-input-block VMEM budget (Pallas double-buffers it)."""
    try:
        vmem = pltpu.get_tpu_info().vmem_capacity_bytes
        # ~8 MiB on 128-MiB-VMEM parts (v5e/v6e), ~4 MiB on 64-MiB parts (v7x).
        return max(2 * 1024 * 1024, min(8 * 1024 * 1024, vmem // 16))
    except Exception:
        return 6 * 1024 * 1024


def _plan_rows(D, L, itemsize, budget_bytes):
    """Pick TR (rows of 128 lanes per block) and Rp (padded row count).

    Guarantees:
      * Rp % TR == 0 and (TR % 8 == 0 or TR == Rp)  -> every block satisfies the
        (8, 128) rule exactly; no ragged edge blocks, no masked stores.
      * D * TR * 128 * itemsize <= budget_bytes      -> VMEM budget always enforced.
      * TR <= 256                                    -> f32 accumulator <= 128 KiB.
      * >= 2 row-steps whenever R >= 16              -> both v7x TCs get work even at N=1.
    """
    R = -(-L // 128)                                  # rows of 128 lanes needed
    cap = budget_bytes // (D * itemsize * 128)
    cap = max(8, min(cap, 256))
    if R >= 16:
        cap = min(cap, max(8, (R // 2) // 8 * 8))

    if R <= cap:
        return R, R                                   # one block (full-dim exception)

    best = 0
    t = 8
    while t <= cap:                                   # largest multiple-of-8 divisor
        if R % t == 0:
            best = t
        t += 8
    if best:
        return best, R                                # no padding needed

    TR = max(8, cap // 8 * 8)                         # rare: pad rows up to multiple of TR
    return TR, (-(-R // TR)) * TR


# --------------------------------------------------------------------------- wrapper

def disparity_regression(x: jax.Array) -> jax.Array:
    """x: [N, D, H, W] float (f32 or bf16); returns [N, 1, H, W] in x.dtype."""
    N, D, H, W = x.shape
    L = H * W
    itemsize = jnp.dtype(x.dtype).itemsize

    TR, Rp = _plan_rows(D, L, itemsize, _per_buffer_budget_bytes())
    Lp = Rp * 128

    xf = x.reshape(N, D, L)
    if Lp != L:
        # Rare path (L not a multiple of 128, or no nice row divisor): zero-pad.
        xf = jnp.pad(xf, ((0, 0), (0, 0), (0, Lp - L)))
    xf = xf.reshape(N, D, Rp, 128)

    grid = (N, Rp // TR)

    in_block = D * TR * 128 * itemsize
    out_block = TR * 128 * itemsize
    vmem_limit = int(2 * in_block + 2 * out_block + 4 * 1024 * 1024)

    cost = pl.CostEstimate(
        flops=2 * N * D * L,
        transcendentals=0,
        bytes_accessed=N * L * (D + 1) * itemsize,
    )

    out = pl.pallas_call(
        _disparity_regression_kernel,
        out_shape=jax.ShapeDtypeStruct((N, Rp, 128), x.dtype),
        grid_spec=pltpu.PrefetchScalarGridSpec(
            num_scalar_prefetch=0,
            grid=grid,
            in_specs=[
                # Batch squeezed, full D, TR contiguous rows of 128 lanes.
                pl.BlockSpec((None, D, TR, 128), lambda n, r: (n, 0, r, 0)),
            ],
            out_specs=pl.BlockSpec((None, TR, 128), lambda n, r: (n, r, 0)),
        ),
        compiler_params=pltpu.CompilerParams(
            dimension_semantics=("parallel", "parallel"),
            vmem_limit_bytes=vmem_limit,
        ),
        cost_estimate=cost,
    )(xf)

    out = out.reshape(N, Lp)
    if Lp != L:
        out = out[:, :L]
    return out.reshape(N, 1, H, W)


# --------------------------------------------------------------------------- tests

def _reference(x):
    D = x.shape[1]
    disp = jnp.arange(D, dtype=jnp.float32).reshape(1, D, 1, 1)
    return jnp.sum(x.astype(jnp.float32) * disp, axis=1, keepdims=True)


if __name__ == "__main__":
    key = jax.random.PRNGKey(0)

    # --- Test 1: small shape matching the module's typical toy usage (f32) ---
    N, D, H, W = 2, 4, 16, 16  # maxdisp = 4; L = 256 -> no padding
    logits = jax.random.normal(key, (N, D, H, W), dtype=jnp.float32)
    x = jax.nn.softmax(logits, axis=1)  # typical input is a softmax over disparity

    out = jax.block_until_ready(disparity_regression(x))
    ref = _reference(x)
    assert out.shape == (N, 1, H, W), out.shape
    assert jnp.allclose(out, ref.astype(out.dtype), atol=1e-5, rtol=1e-5), "f32 mismatch"

    # --- Test 2: bf16 input, wide W -> multiple row-tiles along the flattened axis ---
    N2, D2, H2, W2 = 1, 8, 16, 640  # L = 10240 -> R = 80, TR = 40, 2 row-steps
    logits2 = jax.random.normal(jax.random.PRNGKey(1), (N2, D2, H2, W2), dtype=jnp.float32)
    x2 = jax.nn.softmax(logits2, axis=1).astype(jnp.bfloat16)

    out2 = jax.block_until_ready(disparity_regression(x2))
    ref2 = _reference(x2).astype(jnp.bfloat16)
    assert out2.shape == (N2, 1, H2, W2), out2.shape
    assert jnp.allclose(out2.astype(jnp.float32), ref2.astype(jnp.float32),
                        atol=5e-2, rtol=2e-2), "bf16 mismatch"

    # --- Test 3: awkward row count (R = 36, no multiple-of-8 divisor) -> pad path ---
    N3, D3, H3, W3 = 1, 4, 36, 128
    logits3 = jax.random.normal(jax.random.PRNGKey(2), (N3, D3, H3, W3), dtype=jnp.float32)
    x3 = jax.nn.softmax(logits3, axis=1)

    out3 = jax.block_until_ready(disparity_regression(x3))
    ref3 = _reference(x3)
    assert out3.shape == (N3, 1, H3, W3), out3.shape
    assert jnp.allclose(out3, ref3.astype(out3.dtype), atol=1e-5, rtol=1e-5), "pad-path mismatch"

    # --- Test 4: H*W not a multiple of 128 -> lane padding path ---
    N4, D4, H4, W4 = 1, 4, 10, 12
    logits4 = jax.random.normal(jax.random.PRNGKey(3), (N4, D4, H4, W4), dtype=jnp.float32)
    x4 = jax.nn.softmax(logits4, axis=1)

    out4 = jax.block_until_ready(disparity_regression(x4))
    ref4 = _reference(x4)
    assert out4.shape == (N4, 1, H4, W4), out4.shape
    assert jnp.allclose(out4, ref4.astype(out4.dtype), atol=1e-5, rtol=1e-5), "lane-pad mismatch"

    print("KERNEL_OK")
</pallas_src>

<mosaic_0001>
module attributes {stable_mosaic.version = 11 : i64} {
  func.func @_disparity_regression_kernel(%arg0: i32, %arg1: i32, %arg2: memref<1x4x2x128xf32, #tpu.memory_space<vmem>>, %arg3: memref<1x2x128xf32, #tpu.memory_space<vmem>>) attributes {dimension_semantics = [#tpu.dimension_semantics<parallel>, #tpu.dimension_semantics<parallel>], iteration_bounds = array<i64: 2, 1>, scalar_prefetch = 0 : i64, scratch_operands = 0 : i64, tpu.core_type = #tpu.core_type<tc>, window_params = [{transform_indices = @transform_0, window_bounds = array<i64: 1, 4, 2, 128>}, {transform_indices = @transform_1, window_bounds = array<i64: 1, 2, 128>}]} {
    %cst = arith.constant 0.000000e+00 : f32
    %0 = vector.broadcast %cst : f32 to vector<2x128xf32>
    %cst_0 = arith.constant 0.000000e+00 : f32
    %c0_i32 = arith.constant 0 : i32
    %c0 = arith.constant 0 : index
    %1 = arith.index_cast %c0_i32 : i32 to index
    %c0_1 = arith.constant 0 : index
    %c0_2 = arith.constant 0 : index
    %2 = vector.load %arg2[%c0, %1, %c0_1, %c0_2] : memref<1x4x2x128xf32, #tpu.memory_space<vmem>>, vector<1x1x2x128xf32>
    %3 = vector.shape_cast %2 : vector<1x1x2x128xf32> to vector<2x128xf32>
    %4 = vector.broadcast %cst_0 : f32 to vector<2x128xf32>
    %5 = arith.mulf %3, %4 : vector<2x128xf32>
    %6 = arith.addf %0, %5 : vector<2x128xf32>
    %cst_3 = arith.constant 1.000000e+00 : f32
    %7 = arith.addf %cst_0, %cst_3 : f32
    %c1_i32 = arith.constant 1 : i32
    %c0_4 = arith.constant 0 : index
    %8 = arith.index_cast %c1_i32 : i32 to index
    %c0_5 = arith.constant 0 : index
    %c0_6 = arith.constant 0 : index
    %9 = vector.load %arg2[%c0_4, %8, %c0_5, %c0_6] : memref<1x4x2x128xf32, #tpu.memory_space<vmem>>, vector<1x1x2x128xf32>
    %10 = vector.shape_cast %9 : vector<1x1x2x128xf32> to vector<2x128xf32>
    %11 = vector.broadcast %7 : f32 to vector<2x128xf32>
    %12 = arith.mulf %10, %11 : vector<2x128xf32>
    %13 = arith.addf %6, %12 : vector<2x128xf32>
    %cst_7 = arith.constant 1.000000e+00 : f32
    %14 = arith.addf %7, %cst_7 : f32
    %c2_i32 = arith.constant 2 : i32
    %c0_8 = arith.constant 0 : index
    %15 = arith.index_cast %c2_i32 : i32 to index
    %c0_9 = arith.constant 0 : index
    %c0_10 = arith.constant 0 : index
    %16 = vector.load %arg2[%c0_8, %15, %c0_9, %c0_10] : memref<1x4x2x128xf32, #tpu.memory_space<vmem>>, vector<1x1x2x128xf32>
    %17 = vector.shape_cast %16 : vector<1x1x2x128xf32> to vector<2x128xf32>
    %18 = vector.broadcast %14 : f32 to vector<2x128xf32>
    %19 = arith.mulf %17, %18 : vector<2x128xf32>
    %20 = arith.addf %13, %19 : vector<2x128xf32>
    %cst_11 = arith.constant 1.000000e+00 : f32
    %21 = arith.addf %14, %cst_11 : f32
    %c3_i32 = arith.constant 3 : i32
    %c0_12 = arith.constant 0 : index
    %22 = arith.index_cast %c3_i32 : i32 to index
    %c0_13 = arith.constant 0 : index
    %c0_14 = arith.constant 0 : index
    %23 = vector.load %arg2[%c0_12, %22, %c0_13, %c0_14] : memref<1x4x2x128xf32, #tpu.memory_space<vmem>>, vector<1x1x2x128xf32>
    %24 = vector.shape_cast %23 : vector<1x1x2x128xf32> to vector<2x128xf32>
    %25 = vector.broadcast %21 : f32 to vector<2x128xf32>
    %26 = arith.mulf %24, %25 : vector<2x128xf32>
    %27 = arith.addf %20, %26 : vector<2x128xf32>
    %cst_15 = arith.constant 1.000000e+00 : f32
    %28 = arith.addf %21, %cst_15 : f32
    %c4_i32 = arith.constant 4 : i32
    %c0_16 = arith.constant 0 : index
    %c0_17 = arith.constant 0 : index
    %c0_18 = arith.constant 0 : index
    %29 = vector.load %arg3[%c0_16, %c0_17, %c0_18] : memref<1x2x128xf32, #tpu.memory_space<vmem>>, vector<1x2x128xf32>
    %30 = vector.shape_cast %29 : vector<1x2x128xf32> to vector<2x128xf32>
    %31 = vector.shape_cast %27 : vector<2x128xf32> to vector<1x2x128xf32>
    tpu.vector_store %arg3[%c0_16, %c0_17, %c0_18], %31 {strides = array<i32>} : memref<1x2x128xf32, #tpu.memory_space<vmem>>, vector<1x2x128xf32>,
    return
  }
  func.func @transform_0(%arg0: i32, %arg1: i32) -> (i32, i32, i32, i32) {
    %c0_i32 = arith.constant 0 : i32
    %c0_i32_0 = arith.constant 0 : i32
    %c0_i32_1 = arith.constant 0 : i32
    return %arg0, %c0_i32, %arg1, %c0_i32_0 : i32, i32, i32, i32
  }
  func.func @transform_1(%arg0: i32, %arg1: i32) -> (i32, i32, i32) {
    %c0_i32 = arith.constant 0 : i32
    %c0_i32_0 = arith.constant 0 : i32
    return %arg0, %arg1, %c0_i32 : i32, i32, i32
  }
}

</mosaic_0001>

<llo_original>
// kernel: tpu_custom_call.1
$region0: #{tpu_custom_call.1}
  #allocation0 [shape = 'u32[]', space=smem, size = 0x4, offset = 0x4, fixed_abs, tag = 'smem constant byte address 0x4 - core index']
  #allocation1 [shape = 'u32[144,128]{1,0:T(1,128)}', space=vmem, size = 0x12000, scoped, tag = 'internal scratch']
  %s0 = inlined_call_operand.hbm [shape: f32[2,4,2,128], index: 0, kind: input, shape index: {}]
  %s1 = inlined_call_operand.hbm [shape: f32[2,2,128], index: 1, kind: output, shape index: {}]
  %s2 = sld [smem:[#allocation0]]
  $region41: #{tpu_custom_call.1} parent=0
    _
  %s4 = ssub.s32 1, %s2
  %s5 = scalar_select 0, %s4, %s2
  $region1: #{tpu_custom_call.1} parent=0
    #allocation2 [shape = 'u8[8192]{0}', space=vmem, size = 0x2000, scoped, tag = 'input window, operand 0']
    #allocation3 [shape = 's32[2]{0}', space=sflag, size = 0x8, scoped, tag = 'scoped memory for tpu_custom_call.1']
    #allocation4 [shape = 's32[2]{0}', space=sflag, size = 0x8, scoped, tag = 'scoped memory for tpu_custom_call.1']
    #allocation5 [shape = 'u8[2048]{0}', space=vmem, size = 0x800, scoped, tag = 'output window, operand 0']
    %6 = vsyncpa [#allocation3], 0
    %s7 = scalar_lea.sflag [#allocation3], 1
    %8 = vsyncpa %s7, 0
    %9 = vsyncpa [#allocation4], 0
    %s10 = scalar_lea.sflag [#allocation4], 1
    %11 = vsyncpa %s10, 0
    loop: start=0, step=1, limit=4
    $region2: #{tpu_custom_call.1} parent=1 // loop_pre_header
      _
    $region3: #{tpu_custom_call.1} parent=1 // loop_header
      %s13 = sphi 0, %s17
      %p14 = scmp.ge.s32.totalorder %s13, 4
      %s20 = sphi 0, %s32
      %s21 = sphi 0, %s28
      %s22 = sphi 0, %s20
      %s23 = sphi 0, %s21
      %s24 = sphi 0, %s22
      %s25 = sphi 0, %s23
      %s37 = sphi 0, %s39
      %s40 = sphi 0, %s37
      %s41 = sphi 0, %s40
      %s57 = sphi 0, %s41
      %s65 = sphi 0, %s67
      %s68 = sphi 0, %s65
      %s69 = sphi 0, %s68
      %s85 = sphi 0, %s69
    $region4: #{tpu_custom_call.1} parent=1 // loop_header_branch
      %16 = sbr.rel (%p14) target = $region8
    $region5: #{tpu_custom_call.1} parent=1 // loop_body
      %s18 = ssub.s32 %s13, 1
      %s19 = ssub.s32 %s13, 2
      %s26 = sadd.s32 1, %s21
      %p27 = scmp.ge.s32.totalorder %s26, 1
      %s28 = scalar_select %p27, 0, %s26
      %s29 = sadd.s32 1, %s20
      %s30 = scalar_select %p27, %s29, %s20
      %p31 = scmp.ge.s32.totalorder %s30, 2
      %s32 = scalar_select %p31, 0, %s30
      %s33 = ssub.s32 %s20, %s32
      %s34 = ssub.s32 %s21, %s28
      %s35 = sor.u32 %s33, %s34
      %p36 = scmp.eq.s32.totalorder %s35, 0
      %s38 = sadd.s32 %s37, 1
      %s39 = scalar_select %p36, %s37, %s38
      %p42 = pneg %p36
      %p43 = scmp.eq.s32.totalorder %s13, 1
      %p44 = por %p42, %p43
      %p45 = scmp.ne.s32.totalorder %s37, %s40
      %p46 = scmp.eq.s32.totalorder %s13, 0
      %p47 = por %p45, %p46
      %p48 = scmp.ne.s32.totalorder %s37, %s40
      %p49 = scmp.eq.s32.totalorder %s18, 1
      %p50 = por %p48, %p49
      %p51 = scmp.ne.s32.totalorder %s40, %s41
      %p52 = scmp.eq.s32.totalorder %s18, 0
      %p53 = por %p51, %p52
      %p54 = scmp.ne.s32.totalorder %s40, %s41
      %p55 = scmp.eq.s32.totalorder %s19, 1
      %p56 = por %p54, %p55
      %p58 = scmp.ne.s32.totalorder %s41, %s57
      %p59 = scmp.eq.s32.totalorder %s19, 0
      %p60 = por %p58, %p59
      %s61 = ssub.s32 %s20, %s32
      %s62 = ssub.s32 %s21, %s28
      %s63 = sor.u32 %s61, %s62
      %p64 = scmp.eq.s32.totalorder %s63, 0
      %s66 = sadd.s32 %s65, 1
      %s67 = scalar_select %p64, %s65, %s66
      %p70 = pneg %p64
      %p71 = scmp.eq.s32.totalorder %s13, 1
      %p72 = por %p70, %p71
      %p73 = scmp.ne.s32.totalorder %s65, %s68
      %p74 = scmp.eq.s32.totalorder %s13, 0
      %p75 = por %p73, %p74
      %p76 = scmp.ne.s32.totalorder %s65, %s68
      %p77 = scmp.eq.s32.totalorder %s18, 1
      %p78 = por %p76, %p77
      %p79 = scmp.ne.s32.totalorder %s68, %s69
      %p80 = scmp.eq.s32.totalorder %s18, 0
      %p81 = por %p79, %p80
      %p82 = scmp.ne.s32.totalorder %s68, %s69
      %p83 = scmp.eq.s32.totalorder %s19, 1
      %p84 = por %p82, %p83
      %p86 = scmp.ne.s32.totalorder %s69, %s85
      %p87 = scmp.eq.s32.totalorder %s19, 0
      %p88 = por %p86, %p87
      %p89 = scmp.le.s32.totalorder 1, %s13
      %p90 = scmp.lt.s32.totalorder %s13, 3
      %p91 = pnand %p89, %p90
      %p92 = pneg %p91
      // Predicated region
      $region9: #{tpu_custom_call.1} parent=5 // pred_check
        _
      $region10: #{tpu_custom_call.1} parent=5 // pred_check_branch
        %94 = sbr.rel (%p91) target = $region12
      $region11: #{tpu_custom_call.1} parent=5 // pred_region
        %s95 = ssub.s32 %s13, 1
      $region12: #{tpu_custom_call.1} parent=5 // pred_fallthru
        _
      %p96 = scmp.lt.s32.totalorder %s13, 2
      // Predicated region
      $region13: #{tpu_custom_call.1} parent=5 // pred_check
        %p97 = pneg %p96
      $region14: #{tpu_custom_call.1} parent=5 // pred_check_branch
        %99 = sbr.rel (%p97) target = $region16
      $region15: #{tpu_custom_call.1} parent=5 // pred_region
        // Predicated region
        $region17: #{tpu_custom_call.1} parent=15 // pred_check
          %p100 = pneg %p47
        $region18: #{tpu_custom_call.1} parent=15 // pred_check_branch
          %102 = sbr.rel (%p100) target = $region20
        $region19: #{tpu_custom_call.1} parent=15 // pred_region
          %s103 = sand.u32 %s37, 1
          %s104 = scalar_lea.sflag [#allocation3], %s103
          %s105 = sand.u32 %s37, 1
          %s106 = smul.addr %s105, 8
          %s107 = scalar_lea.vmem [#allocation2], %s106
          %s109 = ssub.s32 128, 128
          %110 = vsyncadd %s104, %s109
          %s111 = smul.addr %s20, 4
          %s112 = sadd.s32 %s21, %s111
          %s113 = smul.addr %s112, 32
          %s114 = scalar_lea.hbm %s0, %s113
          %s115 = sshll.u32 %s107, 4
          %s116 = int_to_ptr.vmem [resolvable:$true] %s115
          %121 = dma.hbm_to_vmem [thread:$0]  %s114, 128, %s116, %s104, 32, 32, 2
        $region20: #{tpu_custom_call.1} parent=15 // pred_fallthru
          _
      $region16: #{tpu_custom_call.1} parent=5 // pred_fallthru
        _
      %p122 = scmp.le.s32.totalorder 1, %s13
      %p123 = scmp.lt.s32.totalorder %s13, 3
      %p124 = pnand %p122, %p123
      %p125 = pneg %p124
      // Predicated region
      $region21: #{tpu_custom_call.1} parent=5 // pred_check
        _
      $region22: #{tpu_custom_call.1} parent=5 // pred_check_branch
        %127 = sbr.rel (%p124) target = $region24
      $region23: #{tpu_custom_call.1} parent=5 // pred_region
        %s128 = ssub.s32 %s13, 1
        %s129 = sand.u32 %s40, 1
        %s130 = scalar_lea.sflag [#allocation3], %s129
        %s131 = sand.u32 %s40, 1
        %s132 = smul.addr %s131, 8
        %s133 = scalar_lea.vmem [#allocation2], %s132
        // Predicated region
        $region25: #{tpu_custom_call.1} parent=23 // pred_check
          %p134 = pneg %p53
        $region26: #{tpu_custom_call.1} parent=23 // pred_check_branch
          %136 = sbr.rel (%p134) target = $region28
        $region27: #{tpu_custom_call.1} parent=23 // pred_region
          %137 = dma.done %s130, 128
        $region28: #{tpu_custom_call.1} parent=23 // pred_fallthru
          _
        %s138 = sand.u32 %s40, 1
        %s139 = scalar_lea.sflag [#allocation3], %s138
        %s140 = sand.u32 %s40, 1
        %s141 = smul.addr %s140, 8
        %s142 = scalar_lea.vmem [#allocation2], %s141
        %p143 = pneg %p53
        %p144 = pneg %p50
        %p145 = pneg %p81
        %p146 = pneg %p78
        %s147 = sand.u32 %s68, 1
        %s148 = scalar_lea.sflag [#allocation4], %s147
        %s149 = sand.u32 %s68, 1
        %s150 = smul.addr %s149, 2
        %s151 = scalar_lea.vmem [#allocation5], %s150
        %v152 = vld [vmem:[%s133] sm:$0x3]
        %v153 = vmul.f32 %v152, 0.0
        %v154 = vadd.f32 %v153, 0.0
        %s155 = scalar_lea.vmem %s133, 2 [#allocation2]
        %v156 = vld [vmem:[%s155] sm:$0x3]
        %v157 = vadd.f32 %v154, %v156
        %s158 = scalar_lea.vmem %s133, 4 [#allocation2]
        %v159 = vld [vmem:[%s158] sm:$0x3]
        %v160 = vmul.f32 %v159, 2.0
        %v161 = vadd.f32 %v157, %v160
        %s162 = scalar_lea.vmem %s133, 6 [#allocation2]
        %v163 = vld [vmem:[%s162] sm:$0x3]
        %v164 = vmul.f32 %v163, 3.0
        %v165 = vadd.f32 %v161, %v164
        %166 = vst [vmem:[%s151] sm:$0x3] %v165
        %s167 = sand.u32 %s68, 1
        %s168 = scalar_lea.sflag [#allocation4], %s167
        %s169 = sand.u32 %s68, 1
        %s170 = smul.addr %s169, 2
        %s171 = scalar_lea.vmem [#allocation5], %s170
        // Predicated region
        $region29: #{tpu_custom_call.1} parent=23 // pred_check
          %p172 = pneg %p78
        $region30: #{tpu_custom_call.1} parent=23 // pred_check_branch
          %174 = sbr.rel (%p172) target = $region32
        $region31: #{tpu_custom_call.1} parent=23 // pred_region
          %s176 = ssub.s32 32, 32
          %177 = vsyncadd %s168, %s176
          %s178 = sadd.s32 %s23, %s22
          %s179 = smul.addr %s178, 32
          %s180 = scalar_lea.hbm %s1, %s179
          %s182 = sshll.u32 %s171, 4
          %s183 = int_to_ptr.vmem [resolvable:$true] %s182
          %185 = dma.vmem_to_hbm [thread:$0]  %s183, 32, %s180, %s168
        $region32: #{tpu_custom_call.1} parent=23 // pred_fallthru
          _
      $region24: #{tpu_custom_call.1} parent=5 // pred_fallthru
        _
      %p186 = scmp.le.s32.totalorder 2, %s13
      // Predicated region
      $region33: #{tpu_custom_call.1} parent=5 // pred_check
        %p187 = pneg %p186
      $region34: #{tpu_custom_call.1} parent=5 // pred_check_branch
        %189 = sbr.rel (%p187) target = $region36
      $region35: #{tpu_custom_call.1} parent=5 // pred_region
        %s190 = ssub.s32 %s13, 2
        // Predicated region
        $region37: #{tpu_custom_call.1} parent=35 // pred_check
          %p191 = pneg %p84
        $region38: #{tpu_custom_call.1} parent=35 // pred_check_branch
          %193 = sbr.rel (%p191) target = $region40
        $region39: #{tpu_custom_call.1} parent=35 // pred_region
          %s194 = sand.u32 %s69, 1
          %s195 = scalar_lea.sflag [#allocation4], %s194
          %s196 = sand.u32 %s69, 1
          %s197 = smul.addr %s196, 2
          %s198 = scalar_lea.vmem [#allocation5], %s197
          %199 = dma.done %s195, 32
        $region40: #{tpu_custom_call.1} parent=35 // pred_fallthru
          _
      $region36: #{tpu_custom_call.1} parent=5 // pred_fallthru
        _
    $region6: #{tpu_custom_call.1} parent=1 // loop_footer
      %s17 = sadd.s32 1, %s13
    $region7: #{tpu_custom_call.1} parent=1 // loop_footer_branch
      %12 = sbr.rel target = $region3
    $region8: #{tpu_custom_call.1} parent=1 // loop_exit
      _
    %200 = vsyncpa [#allocation3], 1
    %s201 = scalar_lea.sflag [#allocation3], 1
    %202 = vsyncpa %s201, 1
    %203 = vsyncpa [#allocation4], 1
    %s204 = scalar_lea.sflag [#allocation4], 1
    %205 = vsyncpa %s204, 1

</llo_original>
